<compile_context>
chip_gen: v6e
topology: v6e:2x2x1
jax: 0.10.0
libtpu: 0.0.40
codegen_flags: <defaults>
</compile_context>

<pallas_src>
import functools

import jax
import jax.numpy as jnp
from jax.experimental import pallas as pl
from jax.experimental.pallas import tpu as pltpu

EPS = 1e-05
LANES = 128
NCORES = 2  # leading "parallel" grid axis; serializes harmlessly on 1-TC chips


def _dice_kernel(nrows_ref, p_ref, t_ref, inter_out, union_out,
                 inter_acc, union_acc, *, steps_per_core, full_tiles,
                 any_masked):
    c = pl.program_id(0)          # core / outer row-range split
    i = pl.program_id(1)          # step within this core's row range
    rpt = p_ref.shape[0]
    global_tile = c * steps_per_core + i

    # Zero this core's vector accumulators at the start of its range.
    @pl.when(i == 0)
    def _():
        inter_acc[...] = jnp.zeros_like(inter_acc)
        union_acc[...] = jnp.zeros_like(union_acc)

    def accumulate(masked):
        p = p_ref[...].astype(jnp.float32)
        t = t_ref[...].astype(jnp.float32)
        if masked:
            # Rows at/after the true row count (ragged last tile or phantom
            # tiles past the end) hold garbage; zero them out.
            local = jax.lax.broadcasted_iota(jnp.int32, (rpt, LANES), 0)
            valid = local < (nrows_ref[0] - global_tile * rpt)
            p = jnp.where(valid, p, 0.0)
            t = jnp.where(valid, t, 0.0)
        # (rpt, 128) -> (rpt//8, 8, 128), reduce leading axis: pure VPU adds
        # into one-vreg accumulators.
        inter_acc[...] += jnp.sum((p * t).reshape(rpt // 8, 8, LANES), axis=0)
        union_acc[...] += jnp.sum((p + t).reshape(rpt // 8, 8, LANES), axis=0)

    if any_masked:
        # Mask only where it can matter; earlier tiles stay mask-free.
        @pl.when(global_tile < full_tiles)
        def _():
            accumulate(False)

        @pl.when(global_tile >= full_tiles)
        def _():
            accumulate(True)
    else:
        accumulate(False)

    # Per-core partial results; the tiny cross-lane reduce + dice formula run
    # in the wrapper, so there is no shared scalar output to race on.
    @pl.when(i == pl.num_programs(1) - 1)
    def _():
        inter_out[...] = inter_acc[...]
        union_out[...] = union_acc[...]


def dice_loss(predict, target, *, target_block_bytes=4 << 20):
    """Pallas equivalent of get_loss.forward(predict, target) -> scalar f32."""
    assert predict.shape == target.shape

    n = predict.size
    p = predict.reshape(-1)
    t = target.reshape(-1)

    rows = n // LANES
    lane_rem = n % LANES

    # Tail (< 128 elements): reduce in plain JAX, no full-array pad/copy.
    if lane_rem:
        p_tail = p[rows * LANES:].astype(jnp.float32)
        t_tail = t[rows * LANES:].astype(jnp.float32)
        tail_inter = jnp.sum(p_tail * t_tail)
        tail_union = jnp.sum(p_tail + t_tail)
        p = p[:rows * LANES]
        t = t[:rows * LANES]
    else:
        tail_inter = jnp.float32(0.0)
        tail_union = jnp.float32(0.0)

    if rows == 0:
        dice = 1.0 - (2.0 * tail_inter + EPS) / (tail_union + EPS)
        return dice.astype(jnp.float32)

    p2 = p.reshape(rows, LANES)
    t2 = t.reshape(rows, LANES)

    # Row-tile size: ~4 MiB per input block (dtype-scaled), multiple of 16 so
    # both f32 (8-sublane) and bf16 (16-sublane) blocks are legal.
    max_item = max(p2.dtype.itemsize, t2.dtype.itemsize)
    rpt = min(target_block_bytes // (LANES * max_item), rows)
    rpt = (rpt // 16) * 16
    if rpt == 0:
        # Tiny input (< 16 rows): pad rows up to 16 (< 8 KiB; zero rows add 0).
        pad_rows = 16 - rows
        p2 = jnp.pad(p2, ((0, pad_rows), (0, 0)))
        t2 = jnp.pad(t2, ((0, pad_rows), (0, 0)))
        rows, rpt = 16, 16

    total_tiles = pl.cdiv(rows, rpt)
    steps_per_core = pl.cdiv(total_tiles, NCORES)
    padded_tiles = steps_per_core * NCORES
    full_tiles = rows // rpt
    any_masked = padded_tiles > full_tiles

    def in_map(c, i, nrows_ref):
        # Clamp phantom tiles (past the end of the array) onto the last real
        # tile; their contribution is masked to zero in the kernel.
        return (jnp.minimum(c * steps_per_core + i, total_tiles - 1), 0)

    def out_map(c, i, nrows_ref):
        return (c, 0)

    # Explicit VMEM budget: 2 inputs x 2 pipeline buffers x block + slack,
    # comfortably under v7x's 64 MiB physical VMEM (128 MiB on v5e/v6e).
    per_step_input_bytes = rpt * LANES * (p2.dtype.itemsize + t2.dtype.itemsize)
    vmem_limit = int(min(max(2 * per_step_input_bytes + (4 << 20), 20 << 20),
                         48 << 20))

    bytes_accessed = (n * (p2.dtype.itemsize + t2.dtype.itemsize)
                      + 2 * NCORES * 8 * LANES * 4 + 4)

    nrows = jnp.array([rows], dtype=jnp.int32)
    kernel = functools.partial(_dice_kernel,
                               steps_per_core=steps_per_core,
                               full_tiles=full_tiles,
                               any_masked=any_masked)

    inter_p, union_p = pl.pallas_call(
        kernel,
        out_shape=(jax.ShapeDtypeStruct((NCORES * 8, LANES), jnp.float32),
                   jax.ShapeDtypeStruct((NCORES * 8, LANES), jnp.float32)),
        grid_spec=pltpu.PrefetchScalarGridSpec(
            num_scalar_prefetch=1,
            grid=(NCORES, steps_per_core),
            in_specs=[
                pl.BlockSpec((rpt, LANES), in_map),
                pl.BlockSpec((rpt, LANES), in_map),
            ],
            out_specs=[
                pl.BlockSpec((8, LANES), out_map),
                pl.BlockSpec((8, LANES), out_map),
            ],
            scratch_shapes=[
                pltpu.VMEM((8, LANES), jnp.float32),
                pltpu.VMEM((8, LANES), jnp.float32),
            ],
        ),
        compiler_params=pltpu.CompilerParams(
            dimension_semantics=("parallel", "arbitrary"),
            vmem_limit_bytes=vmem_limit,
        ),
        cost_estimate=pl.CostEstimate(
            flops=3 * n, transcendentals=0, bytes_accessed=bytes_accessed),
    )(nrows, p2, t2)

    inter = jnp.sum(inter_p) + tail_inter
    union = jnp.sum(union_p) + tail_union
    dice = 1.0 - (2.0 * inter + EPS) / (union + EPS)
    return dice.astype(jnp.float32)


def dice_loss_ref(predict, target):
    intersection = jnp.sum(predict * target)
    union = jnp.sum(predict + target)
    return 1.0 - (2.0 * intersection + EPS) / (union + EPS)


if __name__ == "__main__":
    key = jax.random.PRNGKey(0)
    kp, kt = jax.random.split(key)

    # Segmentation-style dice loss inputs: N, C, H, W.
    shape = (2, 4, 16, 16)
    predict = jax.nn.sigmoid(jax.random.normal(kp, shape, dtype=jnp.float32))
    target = (jax.random.uniform(kt, shape) > 0.5).astype(jnp.float32)

    out = jax.block_until_ready(dice_loss(predict, target))
    ref = dice_loss_ref(predict, target)
    assert jnp.allclose(out, ref, rtol=1e-5, atol=1e-6), (out, ref)

    # Ragged row-tiling path (last tile partially valid) exercised as well.
    shape2 = (2, 4, 24, 16)
    kp2, kt2 = jax.random.split(kt)
    predict2 = jax.nn.sigmoid(jax.random.normal(kp2, shape2, dtype=jnp.float32))
    target2 = (jax.random.uniform(kt2, shape2) > 0.5).astype(jnp.float32)
    out2 = jax.block_until_ready(dice_loss(predict2, target2))
    ref2 = dice_loss_ref(predict2, target2)
    assert jnp.allclose(out2, ref2, rtol=1e-5, atol=1e-6), (out2, ref2)

    print("KERNEL_OK")
</pallas_src>

<mosaic_0001>
module attributes {stable_mosaic.version = 11 : i64} {
  func.func @_dice_kernel(%arg0: i32, %arg1: i32, %arg2: memref<1xi32, #tpu.memory_space<smem>>, %arg3: memref<16x128xf32, #tpu.memory_space<vmem>>, %arg4: memref<16x128xf32, #tpu.memory_space<vmem>>, %arg5: memref<8x128xf32, #tpu.memory_space<vmem>>, %arg6: memref<8x128xf32, #tpu.memory_space<vmem>>, %arg7: memref<8x128xf32, #tpu.memory_space<vmem>>, %arg8: memref<8x128xf32, #tpu.memory_space<vmem>>) attributes {dimension_semantics = [#tpu.dimension_semantics<parallel>, #tpu.dimension_semantics<arbitrary>], iteration_bounds = array<i64: 2, 1>, scalar_prefetch = 1 : i64, scratch_operands = 2 : i64, tpu.core_type = #tpu.core_type<tc>, window_params = [{transform_indices = @transform_0, window_bounds = array<i64: 16, 128>}, {transform_indices = @transform_1, window_bounds = array<i64: 16, 128>}, {transform_indices = @transform_2, window_bounds = array<i64: 8, 128>}, {transform_indices = @transform_3, window_bounds = array<i64: 8, 128>}]} {
    %c1_i32 = arith.constant 1 : i32
    %0 = arith.muli %arg0, %c1_i32 : i32
    %1 = arith.addi %0, %arg1 : i32
    %c0_i32 = arith.constant 0 : i32
    %2 = arith.cmpi eq, %arg1, %c0_i32 : i32
    %3 = arith.extui %2 : i1 to i32
    %c0_i32_0 = arith.constant 0 : i32
    %4 = arith.cmpi ne, %3, %c0_i32_0 : i32
    scf.if %4 {
      %cst = arith.constant 0.000000e+00 : f32
      %14 = vector.broadcast %cst : f32 to vector<8x128xf32>
      %c0 = arith.constant 0 : index
      %c0_7 = arith.constant 0 : index
      %15 = vector.load %arg7[%c0, %c0_7] : memref<8x128xf32, #tpu.memory_space<vmem>>, vector<8x128xf32>
      tpu.vector_store %arg7[%c0, %c0_7], %14 {strides = array<i32>} : memref<8x128xf32, #tpu.memory_space<vmem>>, vector<8x128xf32>,
      %cst_8 = arith.constant 0.000000e+00 : f32
      %16 = vector.broadcast %cst_8 : f32 to vector<8x128xf32>
      %c0_9 = arith.constant 0 : index
      %c0_10 = arith.constant 0 : index
      %17 = vector.load %arg8[%c0_9, %c0_10] : memref<8x128xf32, #tpu.memory_space<vmem>>, vector<8x128xf32>
      tpu.vector_store %arg8[%c0_9, %c0_10], %16 {strides = array<i32>} : memref<8x128xf32, #tpu.memory_space<vmem>>, vector<8x128xf32>,
    } else {
    }
    %c1_i32_1 = arith.constant 1 : i32
    %5 = arith.cmpi slt, %1, %c1_i32_1 : i32
    %6 = arith.extui %5 : i1 to i32
    %c0_i32_2 = arith.constant 0 : i32
    %7 = arith.cmpi ne, %6, %c0_i32_2 : i32
    scf.if %7 {
      %c0 = arith.constant 0 : index
      %c0_7 = arith.constant 0 : index
      %14 = vector.load %arg3[%c0, %c0_7] : memref<16x128xf32, #tpu.memory_space<vmem>>, vector<16x128xf32>
      %c0_8 = arith.constant 0 : index
      %c0_9 = arith.constant 0 : index
      %15 = vector.load %arg4[%c0_8, %c0_9] : memref<16x128xf32, #tpu.memory_space<vmem>>, vector<16x128xf32>
      %c0_10 = arith.constant 0 : index
      %c0_11 = arith.constant 0 : index
      %16 = vector.load %arg7[%c0_10, %c0_11] : memref<8x128xf32, #tpu.memory_space<vmem>>, vector<8x128xf32>
      %17 = arith.mulf %14, %15 : vector<16x128xf32>
      %18 = vector.shape_cast %17 : vector<16x128xf32> to vector<2x8x128xf32>
      %cst = arith.constant dense<0.000000e+00> : vector<8x128xf32>
      %19 = vector.multi_reduction <add>, %18, %cst [0] : vector<2x8x128xf32> to vector<8x128xf32>
      %20 = arith.addf %16, %19 : vector<8x128xf32>
      %c0_12 = arith.constant 0 : index
      %c0_13 = arith.constant 0 : index
      %21 = vector.load %arg7[%c0_12, %c0_13] : memref<8x128xf32, #tpu.memory_space<vmem>>, vector<8x128xf32>
      tpu.vector_store %arg7[%c0_12, %c0_13], %20 {strides = array<i32>} : memref<8x128xf32, #tpu.memory_space<vmem>>, vector<8x128xf32>,
      %c0_14 = arith.constant 0 : index
      %c0_15 = arith.constant 0 : index
      %22 = vector.load %arg8[%c0_14, %c0_15] : memref<8x128xf32, #tpu.memory_space<vmem>>, vector<8x128xf32>
      %23 = arith.addf %14, %15 : vector<16x128xf32>
      %24 = vector.shape_cast %23 : vector<16x128xf32> to vector<2x8x128xf32>
      %cst_16 = arith.constant dense<0.000000e+00> : vector<8x128xf32>
      %25 = vector.multi_reduction <add>, %24, %cst_16 [0] : vector<2x8x128xf32> to vector<8x128xf32>
      %26 = arith.addf %22, %25 : vector<8x128xf32>
      %c0_17 = arith.constant 0 : index
      %c0_18 = arith.constant 0 : index
      %27 = vector.load %arg8[%c0_17, %c0_18] : memref<8x128xf32, #tpu.memory_space<vmem>>, vector<8x128xf32>
      tpu.vector_store %arg8[%c0_17, %c0_18], %26 {strides = array<i32>} : memref<8x128xf32, #tpu.memory_space<vmem>>, vector<8x128xf32>,
    } else {
    }
    %c1_i32_3 = arith.constant 1 : i32
    %8 = arith.cmpi sge, %1, %c1_i32_3 : i32
    %9 = arith.extui %8 : i1 to i32
    %c0_i32_4 = arith.constant 0 : i32
    %10 = arith.cmpi ne, %9, %c0_i32_4 : i32
    scf.if %10 {
      %c0 = arith.constant 0 : index
      %c0_7 = arith.constant 0 : index
      %14 = vector.load %arg3[%c0, %c0_7] : memref<16x128xf32, #tpu.memory_space<vmem>>, vector<16x128xf32>
      %c0_8 = arith.constant 0 : index
      %c0_9 = arith.constant 0 : index
      %15 = vector.load %arg4[%c0_8, %c0_9] : memref<16x128xf32, #tpu.memory_space<vmem>>, vector<16x128xf32>
      %16 = tpu.iota {dimensions = array<i32: 0>} : vector<16x128xi32>
      %c0_10 = arith.constant 0 : index
      %17 = memref.load %arg2[%c0_10] : memref<1xi32, #tpu.memory_space<smem>>
      %c16_i32 = arith.constant 16 : i32
      %18 = arith.muli %1, %c16_i32 : i32
      %19 = arith.subi %17, %18 : i32
      %20 = vector.broadcast %19 : i32 to vector<16x128xi32>
      %21 = arith.cmpi slt, %16, %20 : vector<16x128xi32>
      %cst = arith.constant 0.000000e+00 : f32
      %22 = vector.broadcast %cst : f32 to vector<16x128xf32>
      %23 = arith.select %21, %14, %22 : vector<16x128xi1>, vector<16x128xf32>
      %cst_11 = arith.constant 0.000000e+00 : f32
      %24 = vector.broadcast %cst_11 : f32 to vector<16x128xf32>
      %25 = arith.select %21, %15, %24 : vector<16x128xi1>, vector<16x128xf32>
      %c0_12 = arith.constant 0 : index
      %c0_13 = arith.constant 0 : index
      %26 = vector.load %arg7[%c0_12, %c0_13] : memref<8x128xf32, #tpu.memory_space<vmem>>, vector<8x128xf32>
      %27 = arith.mulf %23, %25 : vector<16x128xf32>
      %28 = vector.shape_cast %27 : vector<16x128xf32> to vector<2x8x128xf32>
      %cst_14 = arith.constant dense<0.000000e+00> : vector<8x128xf32>
      %29 = vector.multi_reduction <add>, %28, %cst_14 [0] : vector<2x8x128xf32> to vector<8x128xf32>
      %30 = arith.addf %26, %29 : vector<8x128xf32>
      %c0_15 = arith.constant 0 : index
      %c0_16 = arith.constant 0 : index
      %31 = vector.load %arg7[%c0_15, %c0_16] : memref<8x128xf32, #tpu.memory_space<vmem>>, vector<8x128xf32>
      tpu.vector_store %arg7[%c0_15, %c0_16], %30 {strides = array<i32>} : memref<8x128xf32, #tpu.memory_space<vmem>>, vector<8x128xf32>,
      %c0_17 = arith.constant 0 : index
      %c0_18 = arith.constant 0 : index
      %32 = vector.load %arg8[%c0_17, %c0_18] : memref<8x128xf32, #tpu.memory_space<vmem>>, vector<8x128xf32>
      %33 = arith.addf %23, %25 : vector<16x128xf32>
      %34 = vector.shape_cast %33 : vector<16x128xf32> to vector<2x8x128xf32>
      %cst_19 = arith.constant dense<0.000000e+00> : vector<8x128xf32>
      %35 = vector.multi_reduction <add>, %34, %cst_19 [0] : vector<2x8x128xf32> to vector<8x128xf32>
      %36 = arith.addf %32, %35 : vector<8x128xf32>
      %c0_20 = arith.constant 0 : index
      %c0_21 = arith.constant 0 : index
      %37 = vector.load %arg8[%c0_20, %c0_21] : memref<8x128xf32, #tpu.memory_space<vmem>>, vector<8x128xf32>
      tpu.vector_store %arg8[%c0_20, %c0_21], %36 {strides = array<i32>} : memref<8x128xf32, #tpu.memory_space<vmem>>, vector<8x128xf32>,
    } else {
    }
    %c0_i32_5 = arith.constant 0 : i32
    %11 = arith.cmpi eq, %arg1, %c0_i32_5 : i32
    %12 = arith.extui %11 : i1 to i32
    %c0_i32_6 = arith.constant 0 : i32
    %13 = arith.cmpi ne, %12, %c0_i32_6 : i32
    scf.if %13 {
      %c0 = arith.constant 0 : index
      %c0_7 = arith.constant 0 : index
      %14 = vector.load %arg7[%c0, %c0_7] : memref<8x128xf32, #tpu.memory_space<vmem>>, vector<8x128xf32>
      %c0_8 = arith.constant 0 : index
      %c0_9 = arith.constant 0 : index
      %15 = vector.load %arg5[%c0_8, %c0_9] : memref<8x128xf32, #tpu.memory_space<vmem>>, vector<8x128xf32>
      tpu.vector_store %arg5[%c0_8, %c0_9], %14 {strides = array<i32>} : memref<8x128xf32, #tpu.memory_space<vmem>>, vector<8x128xf32>,
      %c0_10 = arith.constant 0 : index
      %c0_11 = arith.constant 0 : index
      %16 = vector.load %arg8[%c0_10, %c0_11] : memref<8x128xf32, #tpu.memory_space<vmem>>, vector<8x128xf32>
      %c0_12 = arith.constant 0 : index
      %c0_13 = arith.constant 0 : index
      %17 = vector.load %arg6[%c0_12, %c0_13] : memref<8x128xf32, #tpu.memory_space<vmem>>, vector<8x128xf32>
      tpu.vector_store %arg6[%c0_12, %c0_13], %16 {strides = array<i32>} : memref<8x128xf32, #tpu.memory_space<vmem>>, vector<8x128xf32>,
    } else {
    }
    return
  }
  func.func @transform_0(%arg0: i32, %arg1: i32, %arg2: memref<1xi32, #tpu.memory_space<smem>>) -> (i32, i32) {
    %c1_i32 = arith.constant 1 : i32
    %0 = arith.muli %arg0, %c1_i32 : i32
    %1 = arith.addi %0, %arg1 : i32
    %c0_i32 = arith.constant 0 : i32
    %2 = arith.minsi %1, %c0_i32 : i32
    %c0_i32_0 = arith.constant 0 : i32
    %c0_i32_1 = arith.constant 0 : i32
    return %2, %c0_i32_0 : i32, i32
  }
  func.func @transform_1(%arg0: i32, %arg1: i32, %arg2: memref<1xi32, #tpu.memory_space<smem>>) -> (i32, i32) {
    %c1_i32 = arith.constant 1 : i32
    %0 = arith.muli %arg0, %c1_i32 : i32
    %1 = arith.addi %0, %arg1 : i32
    %c0_i32 = arith.constant 0 : i32
    %2 = arith.minsi %1, %c0_i32 : i32
    %c0_i32_0 = arith.constant 0 : i32
    %c0_i32_1 = arith.constant 0 : i32
    return %2, %c0_i32_0 : i32, i32
  }
  func.func @transform_2(%arg0: i32, %arg1: i32, %arg2: memref<1xi32, #tpu.memory_space<smem>>) -> (i32, i32) {
    %c0_i32 = arith.constant 0 : i32
    %c0_i32_0 = arith.constant 0 : i32
    return %arg0, %c0_i32 : i32, i32
  }
  func.func @transform_3(%arg0: i32, %arg1: i32, %arg2: memref<1xi32, #tpu.memory_space<smem>>) -> (i32, i32) {
    %c0_i32 = arith.constant 0 : i32
    %c0_i32_0 = arith.constant 0 : i32
    return %arg0, %c0_i32 : i32, i32
  }
}

</mosaic_0001>

<llo_original>
// kernel: tpu_custom_call.1
$region0: #{tpu_custom_call.1}
  #allocation0 [shape = 'u32[]', space=smem, size = 0x4, offset = 0x4, fixed_abs, tag = 'smem constant byte address 0x4 - core index']
  #allocation1 [shape = 'u32[144,128]{1,0:T(1,128)}', space=vmem, size = 0x12000, scoped, tag = 'internal scratch']
  #allocation2 [shape = 'f32[8,128]{1,0:T(8,128)}', space=vmem, size = 0x1000, scoped, tag = 'scratch operand']
  #allocation3 [shape = 'f32[8,128]{1,0:T(8,128)}', space=vmem, size = 0x1000, scoped, tag = 'scratch operand']
  #allocation4 [shape = 's32[1]{0}', space=sflag, size = 0x4, scoped, tag = 'scoped memory for tpu_custom_call.1']
  #allocation5 [shape = 's32[1]{0:T(128)S(6)}', space=smem, size = 0x200, scoped, tag = 'prefetched SMEM operand 0']
  %s0 = inlined_call_operand.<no memory space> [shape: s32[1], index: 0, kind: input, shape index: {}]
  %s1 = inlined_call_operand.hbm [shape: f32[16,128], index: 1, kind: input, shape index: {}]
  %s2 = inlined_call_operand.hbm [shape: f32[16,128], index: 2, kind: input, shape index: {}]
  %s3 = inlined_call_operand.hbm [shape: f32[16,128], index: 3, kind: output, shape index: {0}]
  %s4 = inlined_call_operand.hbm [shape: f32[16,128], index: 4, kind: output, shape index: {1}]
  %5 = xla_tuple %s3, %s4
  %s6 = sld [smem:[#allocation0]]
  $region73: #{tpu_custom_call.1} parent=0
    _
  %s8 = ssub.s32 1, %s6
  %s9 = scalar_select 0, %s8, %s6
  %10 = sst [smem:[#allocation5]] %s0
  $region1: #{tpu_custom_call.1} parent=0
    #allocation6 [shape = 'u8[16384]{0}', space=vmem, size = 0x4000, scoped, tag = 'input window, operand 1']
    #allocation7 [shape = 's32[2]{0}', space=sflag, size = 0x8, scoped, tag = 'scoped memory for tpu_custom_call.1']
    #allocation8 [shape = 's32[2]{0}', space=sflag, size = 0x8, scoped, tag = 'scoped memory for tpu_custom_call.1']
    #allocation9 [shape = 'u8[16384]{0}', space=vmem, size = 0x4000, scoped, tag = 'input window, operand 2']
    #allocation10 [shape = 's32[2]{0}', space=sflag, size = 0x8, scoped, tag = 'scoped memory for tpu_custom_call.1']
    #allocation11 [shape = 'u8[8192]{0}', space=vmem, size = 0x2000, scoped, tag = 'output window, operand 0']
    #allocation12 [shape = 'u8[8192]{0}', space=vmem, size = 0x2000, scoped, tag = 'output window, operand 1']
    #allocation13 [shape = 's32[2]{0}', space=sflag, size = 0x8, scoped, tag = 'scoped memory for tpu_custom_call.1']
    %11 = vsyncpa [#allocation7], 0
    %s12 = scalar_lea.sflag [#allocation7], 1
    %13 = vsyncpa %s12, 0
    %14 = vsyncpa [#allocation10], 0
    %s15 = scalar_lea.sflag [#allocation10], 1
    %16 = vsyncpa %s15, 0
    %17 = vsyncpa [#allocation8], 0
    %s18 = scalar_lea.sflag [#allocation8], 1
    %19 = vsyncpa %s18, 0
    %20 = vsyncpa [#allocation13], 0
    %s21 = scalar_lea.sflag [#allocation13], 1
    %22 = vsyncpa %s21, 0
    loop: start=0, step=1, limit=4
    $region2: #{tpu_custom_call.1} parent=1 // loop_pre_header
      _
    $region3: #{tpu_custom_call.1} parent=1 // loop_header
      %s24 = sphi 0, %s28
      %p25 = scmp.ge.s32.totalorder %s24, 4
      %s31 = sphi 0, %s43
      %s32 = sphi 0, %s39
      %s33 = sphi 0, %s31
      %s34 = sphi 0, %s32
      %s35 = sphi 0, %s33
      %s36 = sphi 0, %s34
      %s52 = sphi 0, %s54
      %s55 = sphi 0, %s52
      %s56 = sphi 0, %s55
      %s72 = sphi 0, %s56
      %s84 = sphi 0, %s86
      %s87 = sphi 0, %s84
      %s88 = sphi 0, %s87
      %s104 = sphi 0, %s88
      %s110 = sphi 0, %s112
      %s113 = sphi 0, %s110
      %s114 = sphi 0, %s113
      %s130 = sphi 0, %s114
      %s136 = sphi 0, %s138
      %s139 = sphi 0, %s136
      %s140 = sphi 0, %s139
      %s156 = sphi 0, %s140
    $region4: #{tpu_custom_call.1} parent=1 // loop_header_branch
      %27 = sbr.rel (%p25) target = $region8
    $region5: #{tpu_custom_call.1} parent=1 // loop_body
      %s29 = ssub.s32 %s24, 1
      %s30 = ssub.s32 %s24, 2
      %s37 = sadd.s32 1, %s32
      %p38 = scmp.ge.s32.totalorder %s37, 1
      %s39 = scalar_select %p38, 0, %s37
      %s40 = sadd.s32 1, %s31
      %s41 = scalar_select %p38, %s40, %s31
      %p42 = scmp.ge.s32.totalorder %s41, 2
      %s43 = scalar_select %p42, 0, %s41
      %s44 = sadd.s32 %s31, %s32
      %p45 = scmp.lt.s32.totalorder %s44, 0
      %s46 = scalar_select %p45, %s44, 0
      %s47 = sadd.s32 %s43, %s39
      %p48 = scmp.lt.s32.totalorder %s47, 0
      %s49 = scalar_select %p48, %s47, 0
      %s50 = ssub.s32 %s46, %s49
      %p51 = scmp.eq.s32.totalorder %s50, 0
      %s53 = sadd.s32 %s52, 1
      %s54 = scalar_select %p51, %s52, %s53
      %p57 = pneg %p51
      %p58 = scmp.eq.s32.totalorder %s24, 1
      %p59 = por %p57, %p58
      %p60 = scmp.ne.s32.totalorder %s52, %s55
      %p61 = scmp.eq.s32.totalorder %s24, 0
      %p62 = por %p60, %p61
      %p63 = scmp.ne.s32.totalorder %s52, %s55
      %p64 = scmp.eq.s32.totalorder %s29, 1
      %p65 = por %p63, %p64
      %p66 = scmp.ne.s32.totalorder %s55, %s56
      %p67 = scmp.eq.s32.totalorder %s29, 0
      %p68 = por %p66, %p67
      %p69 = scmp.ne.s32.totalorder %s55, %s56
      %p70 = scmp.eq.s32.totalorder %s30, 1
      %p71 = por %p69, %p70
      %p73 = scmp.ne.s32.totalorder %s56, %s72
      %p74 = scmp.eq.s32.totalorder %s30, 0
      %p75 = por %p73, %p74
      %s76 = sadd.s32 %s31, %s32
      %p77 = scmp.lt.s32.totalorder %s76, 0
      %s78 = scalar_select %p77, %s76, 0
      %s79 = sadd.s32 %s43, %s39
      %p80 = scmp.lt.s32.totalorder %s79, 0
      %s81 = scalar_select %p80, %s79, 0
      %s82 = ssub.s32 %s78, %s81
      %p83 = scmp.eq.s32.totalorder %s82, 0
      %s85 = sadd.s32 %s84, 1
      %s86 = scalar_select %p83, %s84, %s85
      %p89 = pneg %p83
      %p90 = scmp.eq.s32.totalorder %s24, 1
      %p91 = por %p89, %p90
      %p92 = scmp.ne.s32.totalorder %s84, %s87
      %p93 = scmp.eq.s32.totalorder %s24, 0
      %p94 = por %p92, %p93
      %p95 = scmp.ne.s32.totalorder %s84, %s87
      %p96 = scmp.eq.s32.totalorder %s29, 1
      %p97 = por %p95, %p96
      %p98 = scmp.ne.s32.totalorder %s87, %s88
      %p99 = scmp.eq.s32.totalorder %s29, 0
      %p100 = por %p98, %p99
      %p101 = scmp.ne.s32.totalorder %s87, %s88
      %p102 = scmp.eq.s32.totalorder %s30, 1
      %p103 = por %p101, %p102
      %p105 = scmp.ne.s32.totalorder %s88, %s104
      %p106 = scmp.eq.s32.totalorder %s30, 0
      %p107 = por %p105, %p106
      %s108 = ssub.s32 %s31, %s43
      %p109 = scmp.eq.s32.totalorder %s108, 0
      %s111 = sadd.s32 %s110, 1
      %s112 = scalar_select %p109, %s110, %s111
      %p115 = pneg %p109
      %p116 = scmp.eq.s32.totalorder %s24, 1
      %p117 = por %p115, %p116
      %p118 = scmp.ne.s32.totalorder %s110, %s113
      %p119 = scmp.eq.s32.totalorder %s24, 0
      %p120 = por %p118, %p119
      %p121 = scmp.ne.s32.totalorder %s110, %s113
      %p122 = scmp.eq.s32.totalorder %s29, 1
      %p123 = por %p121, %p122
      %p124 = scmp.ne.s32.totalorder %s113, %s114
      %p125 = scmp.eq.s32.totalorder %s29, 0
      %p126 = por %p124, %p125
      %p127 = scmp.ne.s32.totalorder %s113, %s114
      %p128 = scmp.eq.s32.totalorder %s30, 1
      %p129 = por %p127, %p128
      %p131 = scmp.ne.s32.totalorder %s114, %s130
      %p132 = scmp.eq.s32.totalorder %s30, 0
      %p133 = por %p131, %p132
      %s134 = ssub.s32 %s31, %s43
      %p135 = scmp.eq.s32.totalorder %s134, 0
      %s137 = sadd.s32 %s136, 1
      %s138 = scalar_select %p135, %s136, %s137
      %p141 = pneg %p135
      %p142 = scmp.eq.s32.totalorder %s24, 1
      %p143 = por %p141, %p142
      %p144 = scmp.ne.s32.totalorder %s136, %s139
      %p145 = scmp.eq.s32.totalorder %s24, 0
      %p146 = por %p144, %p145
      %p147 = scmp.ne.s32.totalorder %s136, %s139
      %p148 = scmp.eq.s32.totalorder %s29, 1
      %p149 = por %p147, %p148
      %p150 = scmp.ne.s32.totalorder %s139, %s140
      %p151 = scmp.eq.s32.totalorder %s29, 0
      %p152 = por %p150, %p151
      %p153 = scmp.ne.s32.totalorder %s139, %s140
      %p154 = scmp.eq.s32.totalorder %s30, 1
      %p155 = por %p153, %p154
      %p157 = scmp.ne.s32.totalorder %s140, %s156
      %p158 = scmp.eq.s32.totalorder %s30, 0
      %p159 = por %p157, %p158
      %p160 = scmp.le.s32.totalorder 1, %s24
      %p161 = scmp.lt.s32.totalorder %s24, 3
      %p162 = pnand %p160, %p161
      %p163 = pneg %p162
      // Predicated region
      $region9: #{tpu_custom_call.1} parent=5 // pred_check
        _
      $region10: #{tpu_custom_call.1} parent=5 // pred_check_branch
        %165 = sbr.rel (%p162) target = $region12
      $region11: #{tpu_custom_call.1} parent=5 // pred_region
        %s166 = ssub.s32 %s24, 1
      $region12: #{tpu_custom_call.1} parent=5 // pred_fallthru
        _
      %p167 = scmp.lt.s32.totalorder %s24, 2
      // Predicated region
      $region13: #{tpu_custom_call.1} parent=5 // pred_check
        %p168 = pneg %p167
      $region14: #{tpu_custom_call.1} parent=5 // pred_check_branch
        %170 = sbr.rel (%p168) target = $region16
      $region15: #{tpu_custom_call.1} parent=5 // pred_region
        // Predicated region
        $region17: #{tpu_custom_call.1} parent=15 // pred_check
          %p171 = pneg %p62
        $region18: #{tpu_custom_call.1} parent=15 // pred_check_branch
          %173 = sbr.rel (%p171) target = $region20
        $region19: #{tpu_custom_call.1} parent=15 // pred_region
          %s174 = sand.u32 %s52, 1
          %s175 = scalar_lea.sflag [#allocation7], %s174
          %s176 = sand.u32 %s52, 1
          %s177 = smul.addr %s176, 16
          %s178 = scalar_lea.vmem [#allocation6], %s177
          %s179 = sadd.s32 %s31, %s32
          %p180 = scmp.lt.s32.totalorder %s179, 0
          %s181 = scalar_select %p180, %s179, 0
          %s182 = smul.u32 2, %s181
          %s184 = ssub.s32 256, 256
          %185 = vsyncadd %s175, %s184
          %s186 = smul.addr %s182, 128
          %s187 = scalar_lea.hbm %s1, %s186
          %s188 = sshll.u32 %s178, 4
          %s189 = int_to_ptr.vmem [resolvable:$true] %s188
          %194 = dma.hbm_to_vmem [thread:$0]  %s187, 256, %s189, %s175, 128, 128, 8
        $region20: #{tpu_custom_call.1} parent=15 // pred_fallthru
          _
        // Predicated region
        $region21: #{tpu_custom_call.1} parent=15 // pred_check
          %p195 = pneg %p94
        $region22: #{tpu_custom_call.1} parent=15 // pred_check_branch
          %197 = sbr.rel (%p195) target = $region24
        $region23: #{tpu_custom_call.1} parent=15 // pred_region
          %s198 = sand.u32 %s84, 1
          %s199 = scalar_lea.sflag [#allocation10], %s198
          %s200 = sand.u32 %s84, 1
          %s201 = smul.addr %s200, 16
          %s202 = scalar_lea.vmem [#allocation9], %s201
          %s203 = sadd.s32 %s31, %s32
          %p204 = scmp.lt.s32.totalorder %s203, 0
          %s205 = scalar_select %p204, %s203, 0
          %s206 = smul.u32 2, %s205
          %s208 = ssub.s32 256, 256
          %209 = vsyncadd %s199, %s208
          %s210 = smul.addr %s206, 128
          %s211 = scalar_lea.hbm %s2, %s210
          %s212 = sshll.u32 %s202, 4
          %s213 = int_to_ptr.vmem [resolvable:$true] %s212
          %218 = dma.hbm_to_vmem [thread:$0]  %s211, 256, %s213, %s199, 128, 128, 8
        $region24: #{tpu_custom_call.1} parent=15 // pred_fallthru
          _
      $region16: #{tpu_custom_call.1} parent=5 // pred_fallthru
        _
      %p219 = scmp.le.s32.totalorder 1, %s24
      %p220 = scmp.lt.s32.totalorder %s24, 3
      %p221 = pnand %p219, %p220
      %p222 = pneg %p221
      // Predicated region
      $region25: #{tpu_custom_call.1} parent=5 // pred_check
        _
      $region26: #{tpu_custom_call.1} parent=5 // pred_check_branch
        %224 = sbr.rel (%p221) target = $region28
      $region27: #{tpu_custom_call.1} parent=5 // pred_region
        %s225 = ssub.s32 %s24, 1
        %s226 = sand.u32 %s55, 1
        %s227 = scalar_lea.sflag [#allocation7], %s226
        %s228 = sand.u32 %s55, 1
        %s229 = smul.addr %s228, 16
        %s230 = scalar_lea.vmem [#allocation6], %s229
        // Predicated region
        $region29: #{tpu_custom_call.1} parent=27 // pred_check
          %p231 = pneg %p68
        $region30: #{tpu_custom_call.1} parent=27 // pred_check_branch
          %233 = sbr.rel (%p231) target = $region32
        $region31: #{tpu_custom_call.1} parent=27 // pred_region
          %234 = dma.done %s227, 256
        $region32: #{tpu_custom_call.1} parent=27 // pred_fallthru
          _
        %s235 = sand.u32 %s87, 1
        %s236 = scalar_lea.sflag [#allocation10], %s235
        %s237 = sand.u32 %s87, 1
        %s238 = smul.addr %s237, 16
        %s239 = scalar_lea.vmem [#allocation9], %s238
        // Predicated region
        $region33: #{tpu_custom_call.1} parent=27 // pred_check
          %p240 = pneg %p100
        $region34: #{tpu_custom_call.1} parent=27 // pred_check_branch
          %242 = sbr.rel (%p240) target = $region36
        $region35: #{tpu_custom_call.1} parent=27 // pred_region
          %243 = dma.done %s236, 256
        $region36: #{tpu_custom_call.1} parent=27 // pred_fallthru
          _
        %s244 = sand.u32 %s55, 1
        %s245 = scalar_lea.sflag [#allocation7], %s244
        %s246 = sand.u32 %s55, 1
        %s247 = smul.addr %s246, 16
        %s248 = scalar_lea.vmem [#allocation6], %s247
        %p249 = pneg %p68
        %p250 = pneg %p65
        %s251 = sand.u32 %s87, 1
        %s252 = scalar_lea.sflag [#allocation10], %s251
        %s253 = sand.u32 %s87, 1
        %s254 = smul.addr %s253, 16
        %s255 = scalar_lea.vmem [#allocation9], %s254
        %p256 = pneg %p100
        %p257 = pneg %p97
        %p258 = pneg %p126
        %p259 = pneg %p123
        %s260 = sand.u32 %s113, 1
        %s261 = scalar_lea.sflag [#allocation8], %s260
        %s262 = sand.u32 %s113, 1
        %s263 = smul.addr %s262, 8
        %s264 = scalar_lea.vmem [#allocation11], %s263
        %p265 = pneg %p152
        %p266 = pneg %p149
        %s267 = sand.u32 %s139, 1
        %s268 = scalar_lea.sflag [#allocation13], %s267
        %s269 = sand.u32 %s139, 1
        %s270 = smul.addr %s269, 8
        %s271 = scalar_lea.vmem [#allocation12], %s270
        %s272 = sadd.s32 %s33, %s34
        %p273 = scmp.lt.s32.totalorder %s272, 0
        %s274 = scalar_select %p273, %s272, 0
        %s275 = smul.u32 2, %s274
        %s276 = sadd.s32 %s33, %s34
        %p277 = scmp.lt.s32.totalorder %s276, 0
        %s278 = scalar_select %p277, %s276, 0
        %s279 = smul.u32 2, %s278
        %s280 = sadd.s32 %s33, %s34
        %p281 = scmp.eq.s32.totalorder %s34, 0
        // Predicated region
        $region37: #{tpu_custom_call.1} parent=27 // pred_check
          %p282 = pneg %p281
        $region38: #{tpu_custom_call.1} parent=27 // pred_check_branch
          %284 = sbr.rel (%p282) target = $region40
        $region39: #{tpu_custom_call.1} parent=27 // pred_region
          %285 = vst [vmem:[#allocation2] sm:$0xff] 0.0
          %286 = vst [vmem:[#allocation3] sm:$0xff] 0.0
        $region40: #{tpu_custom_call.1} parent=27 // pred_fallthru
          _
        %p287 = scmp.lt.s32.totalorder %s280, 1
        // Predicated region
        $region41: #{tpu_custom_call.1} parent=27 // pred_check
          %p288 = pneg %p287
        $region42: #{tpu_custom_call.1} parent=27 // pred_check_branch
          %290 = sbr.rel (%p288) target = $region44
        $region43: #{tpu_custom_call.1} parent=27 // pred_region
          %v291 = vld [vmem:[%s230] sm:$0xff]
          %v292 = vld [vmem:[%s230 + $0x8] sm:$0xff]
          %v293 = vld [vmem:[%s239] sm:$0xff]
          %v294 = vld [vmem:[%s239 + $0x8] sm:$0xff]
          %v295 = vld [vmem:[#allocation2] sm:$0xff]
          %v296 = vmul.f32 %v291, %v293
          %v297 = vmul.f32 %v292, %v294
          %v298 = vadd.f32 %v296, %v297
          %v299 = vadd.f32 %v295, %v298
          %300 = vst [vmem:[#allocation2] sm:$0xff] %v299
          %v301 = vld [vmem:[#allocation3] sm:$0xff]
          %v302 = vadd.f32 %v291, %v293
          %v303 = vadd.f32 %v292, %v294
          %v304 = vadd.f32 %v302, %v303
          %v305 = vadd.f32 %v301, %v304
          %306 = vst [vmem:[#allocation3] sm:$0xff] %v305
        $region44: #{tpu_custom_call.1} parent=27 // pred_fallthru
          _
        %p307 = scmp.ge.s32.totalorder %s280, 1
        // Predicated region
        $region45: #{tpu_custom_call.1} parent=27 // pred_check
          %p308 = pneg %p307
        $region46: #{tpu_custom_call.1} parent=27 // pred_check_branch
          %310 = sbr.rel (%p308) target = $region48
        $region47: #{tpu_custom_call.1} parent=27 // pred_region
          %v311 = vld [vmem:[%s230] sm:$0xff]
          %v312 = vld [vmem:[%s230 + $0x8] sm:$0xff]
          %v313 = vld [vmem:[%s239] sm:$0xff]
          %v314 = vld [vmem:[%s239 + $0x8] sm:$0xff]
          %v315 = vlaneseq
          %v316 = vshrl.u32 %v315, 7
          %v317 = vadd.s32 %v316, 8
          %s318 = sld [smem:[#allocation5]]
          %s319 = smul.u32 %s280, 16
          %s320 = ssub.s32 %s318, %s319
          %v321 = vstv %s320
          %vm322 = vcmp.lt.s32.totalorder %v316, %v321
          %vm323 = vcmp.lt.s32.totalorder %v317, %v321
          %v324 = vsel %vm322, %v311, 0.0
          %v325 = vsel %vm323, %v312, 0.0
          %v326 = vsel %vm322, %v313, 0.0
          %v327 = vsel %vm323, %v314, 0.0
          %v328 = vld [vmem:[#allocation2] sm:$0xff]
          %v329 = vmul.f32 %v324, %v326
          %v330 = vmul.f32 %v325, %v327
          %v331 = vadd.f32 %v329, %v330
          %v332 = vadd.f32 %v328, %v331
          %333 = vst [vmem:[#allocation2] sm:$0xff] %v332
          %v334 = vld [vmem:[#allocation3] sm:$0xff]
          %v335 = vadd.f32 %v324, %v326
          %v336 = vadd.f32 %v325, %v327
          %v337 = vadd.f32 %v335, %v336
          %v338 = vadd.f32 %v334, %v337
          %339 = vst [vmem:[#allocation3] sm:$0xff] %v338
        $region48: #{tpu_custom_call.1} parent=27 // pred_fallthru
          _
        // Predicated region
        $region49: #{tpu_custom_call.1} parent=27 // pred_check
          %p340 = pneg %p281
        $region50: #{tpu_custom_call.1} parent=27 // pred_check_branch
          %342 = sbr.rel (%p340) target = $region52
        $region51: #{tpu_custom_call.1} parent=27 // pred_region
          %v343 = vld [vmem:[#allocation2] sm:$0xff]
          %344 = vst [vmem:[%s264] sm:$0xff] %v343
          %v345 = vld [vmem:[#allocation3] sm:$0xff]
          %346 = vst [vmem:[%s271] sm:$0xff] %v345
        $region52: #{tpu_custom_call.1} parent=27 // pred_fallthru
          _
        %s347 = sand.u32 %s113, 1
        %s348 = scalar_lea.sflag [#allocation8], %s347
        %s349 = sand.u32 %s113, 1
        %s350 = smul.addr %s349, 8
        %s351 = scalar_lea.vmem [#allocation11], %s350
        %s352 = sand.u32 %s139, 1
        %s353 = scalar_lea.sflag [#allocation13], %s352
        %s354 = sand.u32 %s139, 1
        %s355 = smul.addr %s354, 8
        %s356 = scalar_lea.vmem [#allocation12], %s355
        // Predicated region
        $region53: #{tpu_custom_call.1} parent=27 // pred_check
          %p357 = pneg %p123
        $region54: #{tpu_custom_call.1} parent=27 // pred_check_branch
          %359 = sbr.rel (%p357) target = $region56
        $region55: #{tpu_custom_call.1} parent=27 // pred_region
          %s361 = ssub.s32 128, 128
          %362 = vsyncadd %s348, %s361
          %s363 = smul.addr %s33, 128
          %s364 = scalar_lea.hbm %s3, %s363
          %s366 = sshll.u32 %s351, 4
          %s367 = int_to_ptr.vmem [resolvable:$true] %s366
          %369 = dma.vmem_to_hbm [thread:$0]  %s367, 128, %s364, %s348
        $region56: #{tpu_custom_call.1} parent=27 // pred_fallthru
          _
        // Predicated region
        $region57: #{tpu_custom_call.1} parent=27 // pred_check
          %p370 = pneg %p149
        $region58: #{tpu_custom_call.1} parent=27 // pred_check_branch
          %372 = sbr.rel (%p370) target = $region60
        $region59: #{tpu_custom_call.1} parent=27 // pred_region
          %s374 = ssub.s32 128, 128
          %375 = vsyncadd %s353, %s374
          %s376 = smul.addr %s33, 128
          %s377 = scalar_lea.hbm %s4, %s376
          %s379 = sshll.u32 %s356, 4
          %s380 = int_to_ptr.vmem [resolvable:$true] %s379
          %382 = dma.vmem_to_hbm [thread:$0]  %s380, 128, %s377, %s353
        $region60: #{tpu_custom_call.1} parent=27 // pred_fallthru
          _
      $region28: #{tpu_custom_call.1} parent=5 // pred_fallthru
        _
      %p383 = scmp.le.s32.totalorder 2, %s24
      // Predicated region
      $region61: #{tpu_custom_call.1} parent=5 // pred_check
        %p384 = pneg %p383
      $region62: #{tpu_custom_call.1} parent=5 // pred_check_branch
        %386 = sbr.rel (%p384) target = $region64
      $region63: #{tpu_custom_call.1} parent=5 // pred_region
        %s387 = ssub.s32 %s24, 2
        // Predicated region
        $region65: #{tpu_custom_call.1} parent=63 // pred_check
          %p388 = pneg %p129
        $region66: #{tpu_custom_call.1} parent=63 // pred_check_branch
          %390 = sbr.rel (%p388) target = $region68
        $region67: #{tpu_custom_call.1} parent=63 // pred_region
          %s391 = sand.u32 %s114, 1
          %s392 = scalar_lea.sflag [#allocation8], %s391
          %s393 = sand.u32 %s114, 1
          %s394 = smul.addr %s393, 8
          %s395 = scalar_lea.vmem [#allocation11], %s394
          %396 = dma.done %s392, 128
        $region68: #{tpu_custom_call.1} parent=63 // pred_fallthru
          _
        // Predicated region
        $region69: #{tpu_custom_call.1} parent=63 // pred_check
          %p397 = pneg %p155
        $region70: #{tpu_custom_call.1} parent=63 // pred_check_branch
          %399 = sbr.rel (%p397) target = $region72
        $region71: #{tpu_custom_call.1} parent=63 // pred_region
          %s400 = sand.u32 %s140, 1
          %s401 = scalar_lea.sflag [#allocation13], %s400
          %s402 = sand.u32 %s140, 1
          %s403 = smul.addr %s402, 8
          %s404 = scalar_lea.vmem [#allocation12], %s403
          %405 = dma.done %s401, 128
        $region72: #{tpu_custom_call.1} parent=63 // pred_fallthru
          _
      $region64: #{tpu_custom_call.1} parent=5 // pred_fallthru
        _
    $region6: #{tpu_custom_call.1} parent=1 // loop_footer
      %s28 = sadd.s32 1, %s24
    $region7: #{tpu_custom_call.1} parent=1 // loop_footer_branch
      %23 = sbr.rel target = $region3
    $region8: #{tpu_custom_call.1} parent=1 // loop_exit
      _
    %406 = vsyncpa [#allocation7], 1
    %s407 = scalar_lea.sflag [#allocation7], 1
    %408 = vsyncpa %s407, 1
    %409 = vsyncpa [#allocation10], 1
    %s410 = scalar_lea.sflag [#allocation10], 1
    %411 = vsyncpa %s410, 1
    %412 = vsyncpa [#allocation8], 1
    %s413 = scalar_lea.sflag [#allocation8], 1
    %414 = vsyncpa %s413, 1
    %415 = vsyncpa [#allocation13], 1
    %s416 = scalar_lea.sflag [#allocation13], 1
    %417 = vsyncpa %s416, 1

</llo_original>
